<compile_context>
chip_gen: v7x
topology: tpu7x:2x2x1
jax: 0.10.0
libtpu: 0.0.40
codegen_flags: <defaults>
</compile_context>

<pallas_src>
import functools

import jax
import jax.numpy as jnp
from jax.experimental import pallas as pl
from jax.experimental.pallas import tpu as pltpu


def _round_up(x, m):
    return (x + m - 1) // m * m


def _l2_normalize_kernel(x_ref, o_ref):
    """Row-wise F.normalize(x, dim=1): x * rsqrt(max(||x||^2, 1e-24))."""
    x = x_ref[...].astype(jnp.float32)
    ss = jnp.sum(x * x, axis=1, keepdims=True)
    inv = jax.lax.rsqrt(jnp.maximum(ss, 1e-24))  # == 1 / max(||x||, 1e-12)
    o_ref[...] = (x * inv).astype(o_ref.dtype)


def _triplet_tile_kernel(margin, lti_ref, lkin_ref, ti_ref, kin_ref,
                         loss_ref, prec_ref):
    # --- normalize the anchor (ti) row tile in f32 ---------------------------
    ti = ti_ref[...].astype(jnp.float32)                               # (tm, D)
    inv = jax.lax.rsqrt(
        jnp.maximum(jnp.sum(ti * ti, axis=1, keepdims=True), 1e-24))
    ti_n = (ti * inv).astype(kin_ref.dtype)                            # MXU dtype

    # --- pairwise distance via MXU; unit norms => dist^2 = 2 - 2 s ----------
    s = jax.lax.dot_general(ti_n, kin_ref[...],
                            (((1,), (1,)), ((), ())),
                            preferred_element_type=jnp.float32)        # (tm, N)
    dist2 = jnp.maximum(2.0 - 2.0 * s, 1e-12)

    # --- mat_sim[i, j] = (label_ti[j] == label_kinect[i]) (module semantics) -
    mat_sim = lti_ref[...] == lkin_ref[...]                            # (tm, N) bool

    # --- batch-hard mining on squared distance (sqrt is monotone) -----------
    hard_p2 = jnp.max(jnp.where(mat_sim, dist2, -1e9), axis=1, keepdims=True)
    hard_n2 = jnp.min(jnp.where(mat_sim, 1e9, dist2), axis=1, keepdims=True)
    # degenerate rows (no positive / no negative) mimic the reference's
    # +/-100000 offsets: clamped loss contribution 0, prec contribution 1.
    hard_p = jnp.where(hard_p2 < 0.0, -1e5,
                       jnp.sqrt(jnp.maximum(hard_p2, 1e-12)))          # (tm, 1)
    hard_n = jnp.where(hard_n2 > 1e8, 1e5,
                       jnp.sqrt(jnp.maximum(hard_n2, 1e-12)))          # (tm, 1)

    # --- MarginRankingLoss(margin)(dist_an, dist_ap, 1) per-row + prec ------
    loss_ref[...] = jnp.maximum(hard_p - hard_n + margin, 0.0)
    prec_ref[...] = (hard_n > hard_p).astype(jnp.float32)


def online_triplet_loss(embeddings_kinect, embeddings_ti,
                        label_kinect, label_ti, margin=0.5,
                        block_rows=None, mxu_dtype=None):
    """Returns (loss, prec) matching OnlineTripletLoss.forward."""
    n, d = embeddings_ti.shape
    assert embeddings_kinect.shape == (n, d)

    if mxu_dtype is None:
        # Feed the MXU bf16 only when the inputs already are bf16; keep f32
        # otherwise so f32 inputs stay bit-accurate vs. the reference.
        mxu_dtype = (jnp.bfloat16
                     if (embeddings_ti.dtype == jnp.bfloat16
                         and embeddings_kinect.dtype == jnp.bfloat16)
                     else jnp.float32)

    n_pad8 = _round_up(n, 8)
    if block_rows is None:
        # keep the ~4 live (tm, N) f32 slabs under ~16 MiB
        block_rows = max(8, min(256, (16 * 1024 * 1024) // (16 * max(n, 1))))
    block_rows = min(_round_up(block_rows, 8), n_pad8)
    num_tiles = pl.cdiv(n, block_rows)

    # --- kernel 1: L2-normalize kinect embeddings once (reused per tile) ----
    norm_rows = min(512, n_pad8)
    kin_n = pl.pallas_call(
        _l2_normalize_kernel,
        out_shape=jax.ShapeDtypeStruct((n, d), mxu_dtype),
        grid=(pl.cdiv(n, norm_rows),),
        in_specs=[pl.BlockSpec((norm_rows, d), lambda i: (i, 0))],
        out_specs=pl.BlockSpec((norm_rows, d), lambda i: (i, 0)),
        compiler_params=pltpu.CompilerParams(
            dimension_semantics=("parallel",)),
    )(embeddings_kinect)

    lti = label_ti.reshape(1, n).astype(jnp.int32)        # columns: label_ti[j]
    lkin = label_kinect.reshape(n, 1).astype(jnp.int32)   # rows: label_kinect[i]

    # --- VMEM budget + cost estimate ----------------------------------------
    item_in = jnp.dtype(embeddings_ti.dtype).itemsize
    item_mxu = jnp.dtype(mxu_dtype).itemsize
    est = (2 * n * d * item_mxu                 # resident kin_n (worst case 2x)
           + 2 * block_rows * d * item_in       # double-buffered ti tile
           + 4 * block_rows * n * 4             # s / dist2 / masked temporaries
           + 2 * n * 4 + 8 * block_rows * 4)    # labels + per-row outputs
    vmem_limit = int(min(max(est * 3 // 2, 16 << 20), 48 << 20))

    cost = pl.CostEstimate(
        flops=2 * n * n * d,
        transcendentals=3 * n,
        bytes_accessed=2 * n * d * item_in + n * d * item_mxu + 8 * n)

    kernel = functools.partial(_triplet_tile_kernel, float(margin))
    per_sample, prec_ind = pl.pallas_call(
        kernel,
        out_shape=(jax.ShapeDtypeStruct((n, 1), jnp.float32),
                   jax.ShapeDtypeStruct((n, 1), jnp.float32)),
        grid=(num_tiles,),
        in_specs=[pl.BlockSpec((1, n), lambda i: (0, 0)),            # label_ti
                  pl.BlockSpec((block_rows, 1), lambda i: (i, 0)),   # label_kinect
                  pl.BlockSpec((block_rows, d), lambda i: (i, 0)),   # emb_ti tile
                  pl.BlockSpec((n, d), lambda i: (0, 0))],           # kin_n resident
        out_specs=(pl.BlockSpec((block_rows, 1), lambda i: (i, 0)),
                   pl.BlockSpec((block_rows, 1), lambda i: (i, 0))),
        compiler_params=pltpu.CompilerParams(
            dimension_semantics=("parallel",),
            vmem_limit_bytes=vmem_limit),
        cost_estimate=cost,
    )(lti, lkin, embeddings_ti, kin_n)

    # MarginRankingLoss(reduction='mean') over the N rows; the reference's
    # `if loss < 0: loss = 0` is a no-op since every per-row term is >= 0.
    loss = jnp.sum(per_sample) / n
    loss = jnp.maximum(loss, 0.0)
    prec = jnp.sum(prec_ind) / n
    return loss, prec

# TODO(synk): the reference also computes loss2/loss3 (ti-ti / kinect-kinect
# batch-hard terms) but never uses them in the returned (loss, prec); that
# dead compute is intentionally omitted here.


if __name__ == "__main__":
    key = jax.random.PRNGKey(0)
    k1, k2, k3, k4 = jax.random.split(key, 4)

    N, D = 8, 32
    embeddings_kinect = jax.random.normal(k1, (N, D), dtype=jnp.float32)
    embeddings_ti = jax.random.normal(k2, (N, D), dtype=jnp.float32)
    label_kinect = jax.random.randint(k3, (N,), 0, 4, dtype=jnp.int32)
    label_ti = jax.random.randint(k4, (N,), 0, 4, dtype=jnp.int32)

    loss, prec = online_triplet_loss(embeddings_kinect, embeddings_ti,
                                     label_kinect, label_ti, margin=0.5)
    jax.block_until_ready((loss, prec))
    print("KERNEL_OK")
</pallas_src>

<mosaic_0001>
module attributes {stable_mosaic.version = 11 : i64} {
  func.func @_l2_normalize_kernel(%arg0: i32, %arg1: memref<8x32xf32, #tpu.memory_space<vmem>>, %arg2: memref<8x32xf32, #tpu.memory_space<vmem>>) attributes {dimension_semantics = [#tpu.dimension_semantics<parallel>], iteration_bounds = array<i64: 1>, scalar_prefetch = 0 : i64, scratch_operands = 0 : i64, tpu.core_type = #tpu.core_type<tc>, window_params = [{transform_indices = @transform_0, window_bounds = array<i64: 8, 32>}, {transform_indices = @transform_1, window_bounds = array<i64: 8, 32>}]} {
    %c0 = arith.constant 0 : index
    %c0_0 = arith.constant 0 : index
    %0 = vector.load %arg1[%c0, %c0_0] : memref<8x32xf32, #tpu.memory_space<vmem>>, vector<8x32xf32>
    %1 = arith.mulf %0, %0 : vector<8x32xf32>
    %cst = arith.constant dense<0.000000e+00> : vector<8xf32>
    %2 = vector.multi_reduction <add>, %1, %cst [1] : vector<8x32xf32> to vector<8xf32>
    %3 = vector.shape_cast %2 : vector<8xf32> to vector<8x1xf32>
    %cst_1 = arith.constant 1.000000e-24 : f32
    %4 = vector.broadcast %cst_1 : f32 to vector<8x1xf32>
    %5 = arith.maximumf %3, %4 : vector<8x1xf32>
    %6 = math.rsqrt %5 : vector<8x1xf32>
    %7 = vector.broadcast %6 : vector<8x1xf32> to vector<8x32xf32>
    %8 = arith.mulf %0, %7 : vector<8x32xf32>
    %c0_2 = arith.constant 0 : index
    %c0_3 = arith.constant 0 : index
    %9 = vector.load %arg2[%c0_2, %c0_3] : memref<8x32xf32, #tpu.memory_space<vmem>>, vector<8x32xf32>
    tpu.vector_store %arg2[%c0_2, %c0_3], %8 {strides = array<i32>} : memref<8x32xf32, #tpu.memory_space<vmem>>, vector<8x32xf32>,
    return
  }
  func.func @transform_0(%arg0: i32) -> (i32, i32) {
    %c0_i32 = arith.constant 0 : i32
    %c0_i32_0 = arith.constant 0 : i32
    return %arg0, %c0_i32 : i32, i32
  }
  func.func @transform_1(%arg0: i32) -> (i32, i32) {
    %c0_i32 = arith.constant 0 : i32
    %c0_i32_0 = arith.constant 0 : i32
    return %arg0, %c0_i32 : i32, i32
  }
}

</mosaic_0001>

<llo_original>
// kernel: tpu_custom_call.1
$region0: #{tpu_custom_call.1}
  #allocation0 [shape = 'u32[]', space=smem, size = 0x4, offset = 0x4, fixed_abs, tag = 'smem constant byte address 0x4 - core index']
  #allocation1 [shape = 'u32[144,128]{1,0:T(1,128)}', space=vmem, size = 0x12000, scoped, tag = 'internal scratch']
  %s0 = inlined_call_operand.hbm [shape: f32[8,32], index: 0, kind: input, shape index: {}]
  %s1 = inlined_call_operand.hbm [shape: f32[8,32], index: 1, kind: output, shape index: {}]
  %s2 = sld [smem:[#allocation0]]
  $region18: #{tpu_custom_call.1} parent=0
    _
  %s4 = ssub.s32 1, %s2
  %s5 = scalar_select 0, %s4, %s2
  $region1: #{tpu_custom_call.1} parent=0
    #allocation2 [shape = 'u8[4096]{0}', space=vmem, size = 0x1000, scoped, tag = 'input window, operand 0, single buffered']
    #allocation3 [shape = 's32[1]{0}', space=sflag, size = 0x4, scoped, tag = 'scoped memory for tpu_custom_call.1']
    #allocation4 [shape = 's32[1]{0}', space=sflag, size = 0x4, scoped, tag = 'scoped memory for tpu_custom_call.1']
    #allocation5 [shape = 'u8[4096]{0}', space=vmem, size = 0x1000, scoped, tag = 'output window, operand 0, single buffered']
    %6 = vsyncpa [#allocation3], 0
    %7 = vsyncpa [#allocation4], 0
    // Predicated region
    $region2: #{tpu_custom_call.1} parent=1 // pred_check
      _
    $region3: #{tpu_custom_call.1} parent=1 // pred_check_branch
      %9 = sbr.rel (0) target = $region5
    $region4: #{tpu_custom_call.1} parent=1 // pred_region
      %s11 = ssub.s32 128, 128
      %12 = vsyncadd [#allocation3], %s11
      %s14 = sshll.u32 [#allocation2], 4
      %s15 = int_to_ptr.vmem [resolvable:$true] %s14
      %17 = dma.hbm_to_vmem [thread:$0]  %s0, 128, %s15, [#allocation3]
    $region5: #{tpu_custom_call.1} parent=1 // pred_fallthru
      _
    // Predicated region
    $region6: #{tpu_custom_call.1} parent=1 // pred_check
      _
    $region7: #{tpu_custom_call.1} parent=1 // pred_check_branch
      %19 = sbr.rel (0) target = $region9
    $region8: #{tpu_custom_call.1} parent=1 // pred_region
      %20 = dma.done [#allocation3], 128
    $region9: #{tpu_custom_call.1} parent=1 // pred_fallthru
      _
    %v21 = vld [vmem:[#allocation2] sm:$0xff]
    %v22 = vmul.f32 %v21, %v21
    %vm23 = vcmask 261120
    %v24 = vsel %vm23, %v22, 0.0
    %25 = vadd.xlane.f32.xlu0 %v24
    %v26 = vpop.xlane.xlu0 %25
    %v27 = vmax.f32 %v26, 1e-24
    %v28 = vrsqrt.pop %v27
    %v29 = vmul.f32 %v21, %v28
    %30 = vst.msk [vmem:[#allocation5] sm:$0xff] %vm23, %v29
    // Predicated region
    $region10: #{tpu_custom_call.1} parent=1 // pred_check
      _
    $region11: #{tpu_custom_call.1} parent=1 // pred_check_branch
      %32 = sbr.rel (0) target = $region13
    $region12: #{tpu_custom_call.1} parent=1 // pred_region
      %s34 = ssub.s32 128, 128
      %35 = vsyncadd [#allocation4], %s34
      %s37 = sshll.u32 [#allocation5], 4
      %s38 = int_to_ptr.vmem [resolvable:$true] %s37
      %40 = dma.vmem_to_hbm [thread:$0]  %s38, 128, %s1, [#allocation4]
    $region13: #{tpu_custom_call.1} parent=1 // pred_fallthru
      _
    // Predicated region
    $region14: #{tpu_custom_call.1} parent=1 // pred_check
      _
    $region15: #{tpu_custom_call.1} parent=1 // pred_check_branch
      %42 = sbr.rel (0) target = $region17
    $region16: #{tpu_custom_call.1} parent=1 // pred_region
      %43 = dma.done [#allocation4], 128
    $region17: #{tpu_custom_call.1} parent=1 // pred_fallthru
      _
    %44 = vsyncpa [#allocation3], 1
    %45 = vsyncpa [#allocation4], 1

</llo_original>
